<compile_context>
chip_gen: v6e
topology: v6e:2x2x1
jax: 0.10.0
libtpu: 0.0.40
codegen_flags: <defaults>
</compile_context>

<pallas_src>
import math
import functools

import jax
import jax.numpy as jnp
from jax import lax
from jax.experimental import pallas as pl
from jax.experimental.pallas import tpu as pltpu


# ----------------------------- small helpers --------------------------------

def _layernorm(x, w, b, eps=1e-5):
    # x: (rows, H) f32, w/b: (H,) f32
    mu = jnp.mean(x, axis=-1, keepdims=True)
    var = jnp.mean((x - mu) ** 2, axis=-1, keepdims=True)
    return (x - mu) * lax.rsqrt(var + eps) * w + b


def _gelu_tanh(x):
    c = math.sqrt(2.0 / math.pi)
    return 0.5 * x * (1.0 + jnp.tanh(c * (x + 0.044715 * x * x * x)))


def _vmem_limit_bytes():
    try:
        cap = pltpu.get_tpu_info().vmem_capacity_bytes
        return int(cap * 3 // 4)          # 96 MiB on v5e/v6e, 48 MiB on v7x
    except Exception:
        return 48 << 20                    # safe on every generation


# ------------------------ kernel 1: LN1 + QKV projection ---------------------

def gpt2_qkv_kernel(x_ref, ln1w_ref, ln1b_ref,
                    wq_ref, bq_ref, wk_ref, bk_ref, wv_ref, bv_ref,
                    q_ref, k_ref, v_ref, *, n_heads):
    H = x_ref.shape[-1]
    hd = H // n_heads
    scale = 1.0 / math.sqrt(hd)

    ln = _layernorm(x_ref[0], ln1w_ref[0], ln1b_ref[0]).astype(jnp.bfloat16)
    q = jnp.dot(ln, wq_ref[...], preferred_element_type=jnp.float32) + bq_ref[0]
    q_ref[0] = (q * scale).astype(jnp.bfloat16)    # fold 1/sqrt(hd) into Q once
    k = jnp.dot(ln, wk_ref[...], preferred_element_type=jnp.float32) + bk_ref[0]
    k_ref[0] = k.astype(jnp.bfloat16)
    v = jnp.dot(ln, wv_ref[...], preferred_element_type=jnp.float32) + bv_ref[0]
    v_ref[0] = v.astype(jnp.bfloat16)


def gpt2_qkv(x, p, n_heads, *, tr=128, vmem_limit=None):
    """x: (B, S, H) f32 -> (q, k, v) each (B, S, H) bf16 (q pre-scaled)."""
    B, S, H = x.shape
    tr = min(tr, S)
    assert S % tr == 0
    if vmem_limit is None:
        vmem_limit = _vmem_limit_bytes()

    def const(b, r):                        # grid-invariant weight blocks
        return (0, 0)

    def wspec(a):
        return pl.BlockSpec(a.shape, const)

    row_spec = pl.BlockSpec((1, tr, H), lambda b, r: (b, r, 0))
    out_sds = jax.ShapeDtypeStruct((B, S, H), jnp.bfloat16)

    kernel = functools.partial(gpt2_qkv_kernel, n_heads=n_heads)
    return pl.pallas_call(
        kernel,
        out_shape=(out_sds, out_sds, out_sds),
        grid=(B, S // tr),
        in_specs=[row_spec,
                  wspec(p["ln1_w"]), wspec(p["ln1_b"]),
                  wspec(p["wq"]), wspec(p["bq"]),
                  wspec(p["wk"]), wspec(p["bk"]),
                  wspec(p["wv"]), wspec(p["bv"])],
        out_specs=(row_spec, row_spec, row_spec),
        compiler_params=pltpu.CompilerParams(
            dimension_semantics=("parallel", "parallel"),
            vmem_limit_bytes=vmem_limit),
    )(x, p["ln1_w"], p["ln1_b"],
      p["wq"], p["bq"], p["wk"], p["bk"], p["wv"], p["bv"])


# -------- kernel 2: flash attention + out proj + residual + LN2 + MLP --------

def gpt2_attn_mlp_kernel(x_ref, q_ref, k_ref, v_ref,
                         wo_ref, bo_ref, ln2w_ref, ln2b_ref,
                         wfc_ref, bfc_ref, wpr_ref, bpr_ref,
                         out_ref,
                         m_sc, l_sc, acc_sc,
                         *, n_heads, tq, tk):
    qi = pl.program_id(1)
    ki = pl.program_id(2)
    n_kv = pl.num_programs(2)

    H = x_ref.shape[-1]
    hd = H // n_heads
    neg = jnp.finfo(jnp.float32).min       # same mask value as the torch module

    # ---- init (once per (batch, q-tile)): reset online-softmax state
    @pl.when(ki == 0)
    def _init():
        m_sc[...] = jnp.full_like(m_sc, neg)
        l_sc[...] = jnp.zeros_like(l_sc)
        acc_sc[...] = jnp.zeros_like(acc_sc)

    # ---- online-softmax accumulation for this kv tile (skip fully-masked tiles)
    @pl.when(ki * tk <= qi * tq + (tq - 1))
    def _accumulate():
        q = q_ref[0]                       # (tq, H) bf16, pre-scaled
        k = k_ref[0]                       # (tk, H) bf16
        v = v_ref[0]                       # (tk, H) bf16

        row = qi * tq + lax.broadcasted_iota(jnp.int32, (tq, tk), 0)
        col = ki * tk + lax.broadcasted_iota(jnp.int32, (tq, tk), 1)
        causal = col <= row

        for h in range(n_heads):
            sl = slice(h * hd, (h + 1) * hd)
            s = lax.dot_general(q[:, sl], k[:, sl], (((1,), (1,)), ((), ())),
                                preferred_element_type=jnp.float32)      # (tq, tk)
            s = jnp.where(causal, s, neg)
            m_prev = m_sc[h]
            m_new = jnp.maximum(m_prev, jnp.max(s, axis=-1, keepdims=True))
            alpha = jnp.exp(m_prev - m_new)
            p = jnp.exp(s - m_new)
            l_sc[h] = alpha * l_sc[h] + jnp.sum(p, axis=-1, keepdims=True)
            acc_sc[h] = alpha * acc_sc[h] + jnp.dot(
                p.astype(jnp.bfloat16), v[:, sl],
                preferred_element_type=jnp.float32)
            m_sc[h] = m_new

    # ---- finalize: per-head output projection (no concat), residuals, LN2, MLP
    @pl.when(ki == n_kv - 1)
    def _finalize():
        attn = jnp.zeros((tq, H), jnp.float32)
        for h in range(n_heads):
            inv_l = pl.reciprocal(l_sc[h], approx=True)                  # EUP slot
            oh = (acc_sc[h] * inv_l).astype(jnp.bfloat16)                # (tq, hd)
            attn = attn + jnp.dot(oh, wo_ref[h * hd:(h + 1) * hd, :],
                                  preferred_element_type=jnp.float32)
        attn = attn + bo_ref[0]
        x1 = x_ref[0] + attn                                             # residual 1

        ln2 = _layernorm(x1, ln2w_ref[0], ln2b_ref[0]).astype(jnp.bfloat16)
        h1 = jnp.dot(ln2, wfc_ref[...], preferred_element_type=jnp.float32) + bfc_ref[0]
        h1 = _gelu_tanh(h1).astype(jnp.bfloat16)
        h2 = jnp.dot(h1, wpr_ref[...], preferred_element_type=jnp.float32) + bpr_ref[0]
        out_ref[0] = x1 + h2                                             # residual 2


def gpt2_attn_mlp(x, q, k, v, p, n_heads, *, tq=128, tk=128, vmem_limit=None):
    """x: (B, S, H) f32 residual stream; q/k/v: (B, S, H) bf16 from gpt2_qkv."""
    B, S, H = x.shape
    assert H % n_heads == 0
    tq = min(tq, S)
    tk = min(tk, S)
    assert S % tq == 0 and S % tk == 0
    nq, nkv = S // tq, S // tk
    hd = H // n_heads
    if vmem_limit is None:
        vmem_limit = _vmem_limit_bytes()

    def const3(b, qi, ki):                 # grid-invariant weight blocks
        return (0, 0)

    def wspec(a):
        return pl.BlockSpec(a.shape, const3)

    q_spec = pl.BlockSpec((1, tq, H), lambda b, qi, ki: (b, qi, 0))   # resident over kv
    kv_spec = pl.BlockSpec((1, tk, H), lambda b, qi, ki: (b, ki, 0))  # streamed over kv

    kernel = functools.partial(gpt2_attn_mlp_kernel, n_heads=n_heads, tq=tq, tk=tk)

    return pl.pallas_call(
        kernel,
        out_shape=jax.ShapeDtypeStruct((B, S, H), jnp.float32),
        grid=(B, nq, nkv),
        in_specs=[q_spec,                 # x (query rows, residual)
                  q_spec,                 # q
                  kv_spec,                # k
                  kv_spec,                # v
                  wspec(p["wo"]), wspec(p["bo"]),
                  wspec(p["ln2_w"]), wspec(p["ln2_b"]),
                  wspec(p["wfc"]), wspec(p["bfc"]),
                  wspec(p["wpr"]), wspec(p["bpr"])],
        out_specs=pl.BlockSpec((1, tq, H), lambda b, qi, ki: (b, qi, 0)),
        scratch_shapes=[
            pltpu.VMEM((n_heads, tq, 1), jnp.float32),     # running max m
            pltpu.VMEM((n_heads, tq, 1), jnp.float32),     # running denom l
            pltpu.VMEM((n_heads, tq, hd), jnp.float32),    # running numerator acc
        ],
        compiler_params=pltpu.CompilerParams(
            dimension_semantics=("parallel", "parallel", "arbitrary"),
            vmem_limit_bytes=vmem_limit),
    )(x, q, k, v,
      p["wo"], p["bo"], p["ln2_w"], p["ln2_b"],
      p["wfc"], p["bfc"], p["wpr"], p["bpr"])


def gpt2_block(x, p, n_heads):
    """One GPT2 transformer block.  x: (B, S, H) f32; p: dict of weights."""
    q, k, v = gpt2_qkv(x, p, n_heads)
    return gpt2_attn_mlp(x, q, k, v, p, n_heads)


# -------------------------- final LN + LM head kernel -------------------------

def gpt2_head_kernel(x_ref, lnw_ref, lnb_ref, wlm_ref, out_ref):
    ln = _layernorm(x_ref[0], lnw_ref[0], lnb_ref[0]).astype(jnp.bfloat16)
    out_ref[0] = jnp.dot(ln, wlm_ref[...], preferred_element_type=jnp.float32)


def gpt2_lnf_head(x, lnf_w, lnf_b, lm_head, *, tv=None, vmem_limit=None):
    B, S, H = x.shape
    V = lm_head.shape[1]
    if tv is None:
        tv = V if V % 128 else min(V, 1024)   # lane-dense vocab tiles when possible
    assert V % tv == 0
    if vmem_limit is None:
        vmem_limit = _vmem_limit_bytes()

    return pl.pallas_call(
        gpt2_head_kernel,
        out_shape=jax.ShapeDtypeStruct((B, S, V), jnp.float32),
        grid=(B, V // tv),
        in_specs=[
            pl.BlockSpec((1, S, H), lambda b, vi: (b, 0, 0)),
            pl.BlockSpec(lnf_w.shape, lambda b, vi: (0, 0)),
            pl.BlockSpec(lnf_b.shape, lambda b, vi: (0, 0)),
            pl.BlockSpec((H, tv), lambda b, vi: (0, vi)),
        ],
        out_specs=pl.BlockSpec((1, S, tv), lambda b, vi: (b, 0, vi)),
        compiler_params=pltpu.CompilerParams(
            dimension_semantics=("parallel", "parallel"),
            vmem_limit_bytes=vmem_limit),
    )(x, lnf_w, lnf_b, lm_head)


# ------------------------------ full GPT2 forward -----------------------------

def gpt2_forward(token_ids, params, n_heads):
    """token_ids: (B, S) int32 -> logits (B, S, V) f32.  Dropouts = identity."""
    B, S = token_ids.shape
    # TODO(synk): wte/wpe embedding gathers are plain-JAX (data-dependent gather,
    # no benefit from a Pallas kernel at these sizes).
    x = params["wte"][token_ids] + params["wpe"][jnp.arange(S)][None, :, :]
    x = x.astype(jnp.float32)
    for blk in params["blocks"]:
        x = gpt2_block(x, blk, n_heads)
    return gpt2_lnf_head(x, params["lnf_w"], params["lnf_b"], params["lm_head"])


# --------------------------- pure-JAX f32 reference ---------------------------

def _ln_ref(v, w, b, eps=1e-5):
    mu = jnp.mean(v, axis=-1, keepdims=True)
    var = jnp.mean((v - mu) ** 2, axis=-1, keepdims=True)
    return (v - mu) / jnp.sqrt(var + eps) * w + b


def _block_ref(x, p, n_heads):
    B, S, H = x.shape
    hd = H // n_heads
    f32 = lambda a: a.astype(jnp.float32)

    xl = _ln_ref(x, p["ln1_w"][0], p["ln1_b"][0])
    q = xl @ f32(p["wq"]) + p["bq"][0]
    k = xl @ f32(p["wk"]) + p["bk"][0]
    v = xl @ f32(p["wv"]) + p["bv"][0]
    q = q.reshape(B, S, n_heads, hd).swapaxes(1, 2)
    k = k.reshape(B, S, n_heads, hd).swapaxes(1, 2)
    v = v.reshape(B, S, n_heads, hd).swapaxes(1, 2)
    s = (q @ k.swapaxes(2, 3)) / math.sqrt(hd)
    col = jnp.arange(S)[None, :]
    row = jnp.arange(S)[:, None]
    s = jnp.where(col <= row, s, jnp.finfo(jnp.float32).min)
    a = jax.nn.softmax(s, axis=-1)
    attn = (a @ v).swapaxes(1, 2).reshape(B, S, H)
    attn = attn @ f32(p["wo"]) + p["bo"][0]
    x = x + attn
    xl2 = _ln_ref(x, p["ln2_w"][0], p["ln2_b"][0])
    h = xl2 @ f32(p["wfc"]) + p["bfc"][0]
    h = 0.5 * h * (1.0 + jnp.tanh(math.sqrt(2.0 / math.pi) * (h + 0.044715 * h ** 3)))
    h = h @ f32(p["wpr"]) + p["bpr"][0]
    return x + h


def gpt2_ref(token_ids, params, n_heads):
    B, S = token_ids.shape
    x = params["wte"][token_ids] + params["wpe"][jnp.arange(S)][None, :, :]
    x = x.astype(jnp.float32)
    for p in params["blocks"]:
        x = _block_ref(x, p, n_heads)
    x = _ln_ref(x, params["lnf_w"][0], params["lnf_b"][0])
    return x @ params["lm_head"].astype(jnp.float32)


# ------------------------------------ main ------------------------------------

if __name__ == "__main__":
    B, S = 2, 8
    n_vocab, n_pos, n_hidden, n_heads, n_blocks = 128, 16, 32, 4, 2
    H, Hm = n_hidden, 4 * n_hidden

    keys = iter(jax.random.split(jax.random.PRNGKey(0), 64))
    nxt = lambda: next(keys)

    def nrm(k, shape, scale=0.02, dtype=jnp.float32):
        return (scale * jax.random.normal(k, shape)).astype(dtype)

    bf16 = jnp.bfloat16
    blocks = []
    for i in range(n_blocks):
        blocks.append({
            "ln1_w": (1.0 + 0.1 * jax.random.normal(nxt(), (1, H))).astype(jnp.float32),
            "ln1_b": nrm(nxt(), (1, H), scale=0.1),
            "wq": nrm(nxt(), (H, H), dtype=bf16), "bq": nrm(nxt(), (1, H)),
            "wk": nrm(nxt(), (H, H), dtype=bf16), "bk": nrm(nxt(), (1, H)),
            "wv": nrm(nxt(), (H, H), dtype=bf16), "bv": nrm(nxt(), (1, H)),
            "wo": nrm(nxt(), (H, H), dtype=bf16), "bo": nrm(nxt(), (1, H)),
            "ln2_w": (1.0 + 0.1 * jax.random.normal(nxt(), (1, H))).astype(jnp.float32),
            "ln2_b": nrm(nxt(), (1, H), scale=0.1),
            "wfc": nrm(nxt(), (H, Hm), dtype=bf16), "bfc": nrm(nxt(), (1, Hm)),
            "wpr": nrm(nxt(), (Hm, H), dtype=bf16), "bpr": nrm(nxt(), (1, H)),
        })

    params = {
        "wte": nrm(nxt(), (n_vocab, H)),
        "wpe": nrm(nxt(), (n_pos, H)),
        "blocks": blocks,
        "lnf_w": (1.0 + 0.1 * jax.random.normal(nxt(), (1, H))).astype(jnp.float32),
        "lnf_b": nrm(nxt(), (1, H), scale=0.1),
        "lm_head": nrm(nxt(), (H, n_vocab), dtype=bf16),
    }

    token_ids = jax.random.randint(nxt(), (B, S), 0, n_vocab, dtype=jnp.int32)

    out = gpt2_forward(token_ids, params, n_heads)
    out = jax.block_until_ready(out)

    ref = gpt2_ref(token_ids, params, n_heads)
    assert out.shape == (B, S, n_vocab)
    # bf16 MXU operands + approx reciprocal => compare against the f32 reference
    # with a loosened tolerance.
    assert jnp.allclose(out, ref, rtol=2e-2, atol=2e-2), \
        f"max abs err {jnp.max(jnp.abs(out - ref))}"

    print("KERNEL_OK")
</pallas_src>

<mosaic_0001>
module attributes {stable_mosaic.version = 11 : i64} {
  func.func @gpt2_qkv_kernel(%arg0: i32, %arg1: i32, %arg2: memref<1x8x32xf32, #tpu.memory_space<vmem>>, %arg3: memref<1x32xf32, #tpu.memory_space<vmem>>, %arg4: memref<1x32xf32, #tpu.memory_space<vmem>>, %arg5: memref<32x32xbf16, #tpu.memory_space<vmem>>, %arg6: memref<1x32xf32, #tpu.memory_space<vmem>>, %arg7: memref<32x32xbf16, #tpu.memory_space<vmem>>, %arg8: memref<1x32xf32, #tpu.memory_space<vmem>>, %arg9: memref<32x32xbf16, #tpu.memory_space<vmem>>, %arg10: memref<1x32xf32, #tpu.memory_space<vmem>>, %arg11: memref<1x8x32xbf16, #tpu.memory_space<vmem>>, %arg12: memref<1x8x32xbf16, #tpu.memory_space<vmem>>, %arg13: memref<1x8x32xbf16, #tpu.memory_space<vmem>>) attributes {dimension_semantics = [#tpu.dimension_semantics<parallel>, #tpu.dimension_semantics<parallel>], iteration_bounds = array<i64: 2, 1>, scalar_prefetch = 0 : i64, scratch_operands = 0 : i64, tpu.core_type = #tpu.core_type<tc>, window_params = [{transform_indices = @transform_0, window_bounds = array<i64: 1, 8, 32>}, {pipeline_mode = #tpu.pipeline_mode<synchronous>, transform_indices = @transform_1, window_bounds = array<i64: 1, 32>}, {pipeline_mode = #tpu.pipeline_mode<synchronous>, transform_indices = @transform_2, window_bounds = array<i64: 1, 32>}, {pipeline_mode = #tpu.pipeline_mode<synchronous>, transform_indices = @transform_3, window_bounds = array<i64: 32, 32>}, {pipeline_mode = #tpu.pipeline_mode<synchronous>, transform_indices = @transform_4, window_bounds = array<i64: 1, 32>}, {pipeline_mode = #tpu.pipeline_mode<synchronous>, transform_indices = @transform_5, window_bounds = array<i64: 32, 32>}, {pipeline_mode = #tpu.pipeline_mode<synchronous>, transform_indices = @transform_6, window_bounds = array<i64: 1, 32>}, {pipeline_mode = #tpu.pipeline_mode<synchronous>, transform_indices = @transform_7, window_bounds = array<i64: 32, 32>}, {pipeline_mode = #tpu.pipeline_mode<synchronous>, transform_indices = @transform_8, window_bounds = array<i64: 1, 32>}, {transform_indices = @transform_9, window_bounds = array<i64: 1, 8, 32>}, {transform_indices = @transform_10, window_bounds = array<i64: 1, 8, 32>}, {transform_indices = @transform_11, window_bounds = array<i64: 1, 8, 32>}]} {
    %c0 = arith.constant 0 : index
    %c0_0 = arith.constant 0 : index
    %c0_1 = arith.constant 0 : index
    %0 = vector.load %arg2[%c0, %c0_0, %c0_1] : memref<1x8x32xf32, #tpu.memory_space<vmem>>, vector<1x8x32xf32>
    %1 = vector.shape_cast %0 : vector<1x8x32xf32> to vector<8x32xf32>
    %c0_2 = arith.constant 0 : index
    %c0_3 = arith.constant 0 : index
    %2 = vector.load %arg3[%c0_2, %c0_3] : memref<1x32xf32, #tpu.memory_space<vmem>>, vector<1x32xf32>
    %3 = vector.shape_cast %2 : vector<1x32xf32> to vector<32xf32>
    %c0_4 = arith.constant 0 : index
    %c0_5 = arith.constant 0 : index
    %4 = vector.load %arg4[%c0_4, %c0_5] : memref<1x32xf32, #tpu.memory_space<vmem>>, vector<1x32xf32>
    %5 = vector.shape_cast %4 : vector<1x32xf32> to vector<32xf32>
    %cst = arith.constant dense<0.000000e+00> : vector<8xf32>
    %6 = vector.multi_reduction <add>, %1, %cst [1] : vector<8x32xf32> to vector<8xf32>
    %7 = vector.shape_cast %6 : vector<8xf32> to vector<8x1xf32>
    %cst_6 = arith.constant 3.200000e+01 : f32
    %8 = vector.broadcast %cst_6 : f32 to vector<8x1xf32>
    %9 = arith.divf %7, %8 : vector<8x1xf32>
    %10 = vector.broadcast %9 : vector<8x1xf32> to vector<8x32xf32>
    %11 = arith.subf %1, %10 : vector<8x32xf32>
    %12 = arith.mulf %11, %11 : vector<8x32xf32>
    %cst_7 = arith.constant dense<0.000000e+00> : vector<8xf32>
    %13 = vector.multi_reduction <add>, %12, %cst_7 [1] : vector<8x32xf32> to vector<8xf32>
    %14 = vector.shape_cast %13 : vector<8xf32> to vector<8x1xf32>
    %cst_8 = arith.constant 3.200000e+01 : f32
    %15 = vector.broadcast %cst_8 : f32 to vector<8x1xf32>
    %16 = arith.divf %14, %15 : vector<8x1xf32>
    %17 = vector.broadcast %9 : vector<8x1xf32> to vector<8x32xf32>
    %18 = arith.subf %1, %17 : vector<8x32xf32>
    %cst_9 = arith.constant 9.99999974E-6 : f32
    %19 = vector.broadcast %cst_9 : f32 to vector<8x1xf32>
    %20 = arith.addf %16, %19 : vector<8x1xf32>
    %21 = math.rsqrt %20 : vector<8x1xf32>
    %22 = vector.broadcast %21 : vector<8x1xf32> to vector<8x32xf32>
    %23 = arith.mulf %18, %22 : vector<8x32xf32>
    %24 = vector.shape_cast %3 : vector<32xf32> to vector<1x32xf32>
    %25 = vector.broadcast %24 : vector<1x32xf32> to vector<8x32xf32>
    %26 = arith.mulf %23, %25 : vector<8x32xf32>
    %27 = vector.shape_cast %5 : vector<32xf32> to vector<1x32xf32>
    %28 = vector.broadcast %27 : vector<1x32xf32> to vector<8x32xf32>
    %29 = arith.addf %26, %28 : vector<8x32xf32>
    %30 = arith.truncf %29 : vector<8x32xf32> to vector<8x32xbf16>
    %c0_10 = arith.constant 0 : index
    %c0_11 = arith.constant 0 : index
    %31 = vector.load %arg5[%c0_10, %c0_11] : memref<32x32xbf16, #tpu.memory_space<vmem>>, vector<32x32xbf16>
    %cst_12 = arith.constant dense<0.000000e+00> : vector<8x32xf32>
    %32 = tpu.matmul %30, %31, %cst_12 {dimension_numbers = #tpu.dot_dimension_numbers<[1], [0], [0], [1], [0, 0, 1, 1], [], []>} : vector<8x32xbf16>, vector<32x32xbf16>, vector<8x32xf32> -> vector<8x32xf32>
    %c0_13 = arith.constant 0 : index
    %c0_14 = arith.constant 0 : index
    %33 = vector.load %arg6[%c0_13, %c0_14] : memref<1x32xf32, #tpu.memory_space<vmem>>, vector<1x32xf32>
    %34 = vector.shape_cast %33 : vector<1x32xf32> to vector<32xf32>
    %35 = vector.shape_cast %34 : vector<32xf32> to vector<1x32xf32>
    %36 = vector.broadcast %35 : vector<1x32xf32> to vector<8x32xf32>
    %37 = arith.addf %32, %36 : vector<8x32xf32>
    %cst_15 = arith.constant 0.353553385 : f32
    %38 = vector.broadcast %cst_15 : f32 to vector<8x32xf32>
    %39 = arith.mulf %37, %38 : vector<8x32xf32>
    %40 = arith.truncf %39 : vector<8x32xf32> to vector<8x32xbf16>
    %c0_16 = arith.constant 0 : index
    %c0_17 = arith.constant 0 : index
    %c0_18 = arith.constant 0 : index
    %41 = vector.load %arg11[%c0_16, %c0_17, %c0_18] : memref<1x8x32xbf16, #tpu.memory_space<vmem>>, vector<1x8x32xbf16>
    %42 = vector.shape_cast %41 : vector<1x8x32xbf16> to vector<8x32xbf16>
    %43 = vector.shape_cast %40 : vector<8x32xbf16> to vector<1x8x32xbf16>
    tpu.vector_store %arg11[%c0_16, %c0_17, %c0_18], %43 {strides = array<i32>} : memref<1x8x32xbf16, #tpu.memory_space<vmem>>, vector<1x8x32xbf16>,
    %c0_19 = arith.constant 0 : index
    %c0_20 = arith.constant 0 : index
    %44 = vector.load %arg7[%c0_19, %c0_20] : memref<32x32xbf16, #tpu.memory_space<vmem>>, vector<32x32xbf16>
    %cst_21 = arith.constant dense<0.000000e+00> : vector<8x32xf32>
    %45 = tpu.matmul %30, %44, %cst_21 {dimension_numbers = #tpu.dot_dimension_numbers<[1], [0], [0], [1], [0, 0, 1, 1], [], []>} : vector<8x32xbf16>, vector<32x32xbf16>, vector<8x32xf32> -> vector<8x32xf32>
    %c0_22 = arith.constant 0 : index
    %c0_23 = arith.constant 0 : index
    %46 = vector.load %arg8[%c0_22, %c0_23] : memref<1x32xf32, #tpu.memory_space<vmem>>, vector<1x32xf32>
    %47 = vector.shape_cast %46 : vector<1x32xf32> to vector<32xf32>
    %48 = vector.shape_cast %47 : vector<32xf32> to vector<1x32xf32>
    %49 = vector.broadcast %48 : vector<1x32xf32> to vector<8x32xf32>
    %50 = arith.addf %45, %49 : vector<8x32xf32>
    %51 = arith.truncf %50 : vector<8x32xf32> to vector<8x32xbf16>
    %c0_24 = arith.constant 0 : index
    %c0_25 = arith.constant 0 : index
    %c0_26 = arith.constant 0 : index
    %52 = vector.load %arg12[%c0_24, %c0_25, %c0_26] : memref<1x8x32xbf16, #tpu.memory_space<vmem>>, vector<1x8x32xbf16>
    %53 = vector.shape_cast %52 : vector<1x8x32xbf16> to vector<8x32xbf16>
    %54 = vector.shape_cast %51 : vector<8x32xbf16> to vector<1x8x32xbf16>
    tpu.vector_store %arg12[%c0_24, %c0_25, %c0_26], %54 {strides = array<i32>} : memref<1x8x32xbf16, #tpu.memory_space<vmem>>, vector<1x8x32xbf16>,
    %c0_27 = arith.constant 0 : index
    %c0_28 = arith.constant 0 : index
    %55 = vector.load %arg9[%c0_27, %c0_28] : memref<32x32xbf16, #tpu.memory_space<vmem>>, vector<32x32xbf16>
    %cst_29 = arith.constant dense<0.000000e+00> : vector<8x32xf32>
    %56 = tpu.matmul %30, %55, %cst_29 {dimension_numbers = #tpu.dot_dimension_numbers<[1], [0], [0], [1], [0, 0, 1, 1], [], []>} : vector<8x32xbf16>, vector<32x32xbf16>, vector<8x32xf32> -> vector<8x32xf32>
    %c0_30 = arith.constant 0 : index
    %c0_31 = arith.constant 0 : index
    %57 = vector.load %arg10[%c0_30, %c0_31] : memref<1x32xf32, #tpu.memory_space<vmem>>, vector<1x32xf32>
    %58 = vector.shape_cast %57 : vector<1x32xf32> to vector<32xf32>
    %59 = vector.shape_cast %58 : vector<32xf32> to vector<1x32xf32>
    %60 = vector.broadcast %59 : vector<1x32xf32> to vector<8x32xf32>
    %61 = arith.addf %56, %60 : vector<8x32xf32>
    %62 = arith.truncf %61 : vector<8x32xf32> to vector<8x32xbf16>
    %c0_32 = arith.constant 0 : index
    %c0_33 = arith.constant 0 : index
    %c0_34 = arith.constant 0 : index
    %63 = vector.load %arg13[%c0_32, %c0_33, %c0_34] : memref<1x8x32xbf16, #tpu.memory_space<vmem>>, vector<1x8x32xbf16>
    %64 = vector.shape_cast %63 : vector<1x8x32xbf16> to vector<8x32xbf16>
    %65 = vector.shape_cast %62 : vector<8x32xbf16> to vector<1x8x32xbf16>
    tpu.vector_store %arg13[%c0_32, %c0_33, %c0_34], %65 {strides = array<i32>} : memref<1x8x32xbf16, #tpu.memory_space<vmem>>, vector<1x8x32xbf16>,
    return
  }
  func.func @transform_0(%arg0: i32, %arg1: i32) -> (i32, i32, i32) {
    %c0_i32 = arith.constant 0 : i32
    %c0_i32_0 = arith.constant 0 : i32
    return %arg0, %arg1, %c0_i32 : i32, i32, i32
  }
  func.func @transform_1(%arg0: i32, %arg1: i32) -> (i32, i32) {
    %c0_i32 = arith.constant 0 : i32
    %c0_i32_0 = arith.constant 0 : i32
    %c0_i32_1 = arith.constant 0 : i32
    return %c0_i32, %c0_i32_0 : i32, i32
  }
  func.func @transform_2(%arg0: i32, %arg1: i32) -> (i32, i32) {
    %c0_i32 = arith.constant 0 : i32
    %c0_i32_0 = arith.constant 0 : i32
    %c0_i32_1 = arith.constant 0 : i32
    return %c0_i32, %c0_i32_0 : i32, i32
  }
  func.func @transform_3(%arg0: i32, %arg1: i32) -> (i32, i32) {
    %c0_i32 = arith.constant 0 : i32
    %c0_i32_0 = arith.constant 0 : i32
    %c0_i32_1 = arith.constant 0 : i32
    return %c0_i32, %c0_i32_0 : i32, i32
  }
  func.func @transform_4(%arg0: i32, %arg1: i32) -> (i32, i32) {
    %c0_i32 = arith.constant 0 : i32
    %c0_i32_0 = arith.constant 0 : i32
    %c0_i32_1 = arith.constant 0 : i32
    return %c0_i32, %c0_i32_0 : i32, i32
  }
  func.func @transform_5(%arg0: i32, %arg1: i32) -> (i32, i32) {
    %c0_i32 = arith.constant 0 : i32
    %c0_i32_0 = arith.constant 0 : i32
    %c0_i32_1 = arith.constant 0 : i32
    return %c0_i32, %c0_i32_0 : i32, i32
  }
  func.func @transform_6(%arg0: i32, %arg1: i32) -> (i32, i32) {
    %c0_i32 = arith.constant 0 : i32
    %c0_i32_0 = arith.constant 0 : i32
    %c0_i32_1 = arith.constant 0 : i32
    return %c0_i32, %c0_i32_0 : i32, i32
  }
  func.func @transform_7(%arg0: i32, %arg1: i32) -> (i32, i32) {
    %c0_i32 = arith.constant 0 : i32
    %c0_i32_0 = arith.constant 0 : i32
    %c0_i32_1 = arith.constant 0 : i32
    return %c0_i32, %c0_i32_0 : i32, i32
  }
  func.func @transform_8(%arg0: i32, %arg1: i32) -> (i32, i32) {
    %c0_i32 = arith.constant 0 : i32
    %c0_i32_0 = arith.constant 0 : i32
    %c0_i32_1 = arith.constant 0 : i32
    return %c0_i32, %c0_i32_0 : i32, i32
  }
  func.func @transform_9(%arg0: i32, %arg1: i32) -> (i32, i32, i32) {
    %c0_i32 = arith.constant 0 : i32
    %c0_i32_0 = arith.constant 0 : i32
    return %arg0, %arg1, %c0_i32 : i32, i32, i32
  }
  func.func @transform_10(%arg0: i32, %arg1: i32) -> (i32, i32, i32) {
    %c0_i32 = arith.constant 0 : i32
    %c0_i32_0 = arith.constant 0 : i32
    return %arg0, %arg1, %c0_i32 : i32, i32, i32
  }
  func.func @transform_11(%arg0: i32, %arg1: i32) -> (i32, i32, i32) {
    %c0_i32 = arith.constant 0 : i32
    %c0_i32_0 = arith.constant 0 : i32
    return %arg0, %arg1, %c0_i32 : i32, i32, i32
  }
}

</mosaic_0001>

<llo_original>
// kernel: tpu_custom_call.1
$region0: #{tpu_custom_call.1}
  #allocation0 [shape = 'u32[]', space=smem, size = 0x4, offset = 0x4, fixed_abs, tag = 'smem constant byte address 0x4 - core index']
  #allocation1 [shape = 'u32[144,128]{1,0:T(1,128)}', space=vmem, size = 0x12000, scoped, tag = 'internal scratch']
  %s0 = inlined_call_operand.hbm [shape: f32[2,8,32], index: 0, kind: input, shape index: {}]
  %s1 = inlined_call_operand.vmem [shape: f32[1,32], index: 1, kind: input, shape index: {}]
  %s2 = inlined_call_operand.vmem [shape: f32[1,32], index: 2, kind: input, shape index: {}]
  %s3 = inlined_call_operand.hbm [shape: bf16[32,32], index: 3, kind: input, shape index: {}]
  %s4 = inlined_call_operand.vmem [shape: f32[1,32], index: 4, kind: input, shape index: {}]
  %s5 = inlined_call_operand.hbm [shape: bf16[32,32], index: 5, kind: input, shape index: {}]
  %s6 = inlined_call_operand.vmem [shape: f32[1,32], index: 6, kind: input, shape index: {}]
  %s7 = inlined_call_operand.hbm [shape: bf16[32,32], index: 7, kind: input, shape index: {}]
  %s8 = inlined_call_operand.vmem [shape: f32[1,32], index: 8, kind: input, shape index: {}]
  %s9 = inlined_call_operand.hbm [shape: bf16[2,8,32], index: 9, kind: output, shape index: {0}]
  %s10 = inlined_call_operand.hbm [shape: bf16[2,8,32], index: 10, kind: output, shape index: {1}]
  %s11 = inlined_call_operand.hbm [shape: bf16[2,8,32], index: 11, kind: output, shape index: {2}]
  %12 = xla_tuple %s9, %s10, %s11
  %s13 = sld [smem:[#allocation0]]
  $region101: #{tpu_custom_call.1} parent=0
    _
  %s15 = ssub.s32 1, %s13
  %s16 = scalar_select 0, %s15, %s13
  $region1: #{tpu_custom_call.1} parent=0
    #allocation2 [shape = 'u8[8192]{0}', space=vmem, size = 0x2000, scoped, tag = 'input window, operand 0']
    #allocation3 [shape = 's32[2]{0}', space=sflag, size = 0x8, scoped, tag = 'scoped memory for tpu_custom_call.1']
    #allocation4 [shape = 's32[2]{0}', space=sflag, size = 0x8, scoped, tag = 'scoped memory for tpu_custom_call.1']
    #allocation5 [shape = 'u8[8192]{0}', space=vmem, size = 0x2000, scoped, tag = 'input window, operand 3, single buffered']
    #allocation6 [shape = 's32[1]{0}', space=sflag, size = 0x4, scoped, tag = 'scoped memory for tpu_custom_call.1']
    #allocation7 [shape = 'u8[8192]{0}', space=vmem, size = 0x2000, scoped, tag = 'input window, operand 5, single buffered']
    #allocation8 [shape = 'u8[8192]{0}', space=vmem, size = 0x2000, scoped, tag = 'input window, operand 7, single buffered']
    #allocation9 [shape = 's32[1]{0}', space=sflag, size = 0x4, scoped, tag = 'scoped memory for tpu_custom_call.1']
    #allocation10 [shape = 'u8[4096]{0}', space=vmem, size = 0x1000, scoped, tag = 'output window, operand 0']
    #allocation11 [shape = 'u8[4096]{0}', space=vmem, size = 0x1000, scoped, tag = 'output window, operand 1']
    #allocation12 [shape = 's32[2]{0}', space=sflag, size = 0x8, scoped, tag = 'scoped memory for tpu_custom_call.1']
    #allocation13 [shape = 'u8[4096]{0}', space=vmem, size = 0x1000, scoped, tag = 'output window, operand 2']
    %17 = vsyncpa [#allocation3], 0
    %s18 = scalar_lea.sflag [#allocation3], 1
    %19 = vsyncpa %s18, 0
    %20 = vsyncpa [#allocation6], 0
    %21 = vsyncpa [#allocation9], 0
    %22 = vsyncpa [#allocation4], 0
    %s23 = scalar_lea.sflag [#allocation4], 1
    %24 = vsyncpa %s23, 0
    %25 = vsyncpa [#allocation12], 0
    %s26 = scalar_lea.sflag [#allocation12], 1
    %27 = vsyncpa %s26, 0
    loop: start=0, step=1, limit=4
    $region2: #{tpu_custom_call.1} parent=1 // loop_pre_header
      _
    $region3: #{tpu_custom_call.1} parent=1 // loop_header
      %s29 = sphi 0, %s33
      %p30 = scmp.ge.s32.totalorder %s29, 4
      %s36 = sphi 0, %s48
      %s37 = sphi 0, %s44
      %s38 = sphi 0, %s36
      %s39 = sphi 0, %s37
      %s40 = sphi 0, %s38
      %s41 = sphi 0, %s39
      %s53 = sphi 0, %s55
      %s56 = sphi 0, %s53
      %s57 = sphi 0, %s56
      %s73 = sphi 0, %s57
      %s77 = sphi 0, %s77
      %s79 = sphi 0, %s77
      %s80 = sphi 0, %s79
      %s94 = sphi 0, %s80
      %s98 = sphi 0, %s98
      %s100 = sphi 0, %s98
      %s101 = sphi 0, %s100
      %s115 = sphi 0, %s101
      %s119 = sphi 0, %s119
      %s121 = sphi 0, %s119
      %s122 = sphi 0, %s121
      %s136 = sphi 0, %s122
      %s140 = sphi 0, %s140
      %s142 = sphi 0, %s140
      %s143 = sphi 0, %s142
      %s157 = sphi 0, %s143
      %s161 = sphi 0, %s161
      %s163 = sphi 0, %s161
      %s164 = sphi 0, %s163
      %s178 = sphi 0, %s164
      %s182 = sphi 0, %s182
      %s184 = sphi 0, %s182
      %s185 = sphi 0, %s184
      %s199 = sphi 0, %s185
      %s203 = sphi 0, %s203
      %s205 = sphi 0, %s203
      %s206 = sphi 0, %s205
      %s220 = sphi 0, %s206
      %s224 = sphi 0, %s224
      %s226 = sphi 0, %s224
      %s227 = sphi 0, %s226
      %s241 = sphi 0, %s227
      %s249 = sphi 0, %s251
      %s252 = sphi 0, %s249
      %s253 = sphi 0, %s252
      %s269 = sphi 0, %s253
      %s277 = sphi 0, %s279
      %s280 = sphi 0, %s277
      %s281 = sphi 0, %s280
      %s297 = sphi 0, %s281
      %s305 = sphi 0, %s307
      %s308 = sphi 0, %s305
      %s309 = sphi 0, %s308
      %s325 = sphi 0, %s309
    $region4: #{tpu_custom_call.1} parent=1 // loop_header_branch
      %32 = sbr.rel (%p30) target = $region8
    $region5: #{tpu_custom_call.1} parent=1 // loop_body
      %s34 = ssub.s32 %s29, 1
      %s35 = ssub.s32 %s29, 2
      %s42 = sadd.s32 1, %s37
      %p43 = scmp.ge.s32.totalorder %s42, 1
      %s44 = scalar_select %p43, 0, %s42
      %s45 = sadd.s32 1, %s36
      %s46 = scalar_select %p43, %s45, %s36
      %p47 = scmp.ge.s32.totalorder %s46, 2
      %s48 = scalar_select %p47, 0, %s46
      %s49 = ssub.s32 %s36, %s48
      %s50 = ssub.s32 %s37, %s44
      %s51 = sor.u32 %s49, %s50
      %p52 = scmp.eq.s32.totalorder %s51, 0
      %s54 = sadd.s32 %s53, 1
      %s55 = scalar_select %p52, %s53, %s54
      %p58 = pneg %p52
      %p59 = scmp.eq.s32.totalorder %s29, 1
      %p60 = por %p58, %p59
      %p61 = scmp.ne.s32.totalorder %s53, %s56
      %p62 = scmp.eq.s32.totalorder %s29, 0
      %p63 = por %p61, %p62
      %p64 = scmp.ne.s32.totalorder %s53, %s56
      %p65 = scmp.eq.s32.totalorder %s34, 1
      %p66 = por %p64, %p65
      %p67 = scmp.ne.s32.totalorder %s56, %s57
      %p68 = scmp.eq.s32.totalorder %s34, 0
      %p69 = por %p67, %p68
      %p70 = scmp.ne.s32.totalorder %s56, %s57
      %p71 = scmp.eq.s32.totalorder %s35, 1
      %p72 = por %p70, %p71
      %p74 = scmp.ne.s32.totalorder %s57, %s73
      %p75 = scmp.eq.s32.totalorder %s35, 0
      %p76 = por %p74, %p75
      %s78 = sadd.s32 %s77, 1
      %p81 = scmp.eq.s32.totalorder %s29, 1
      %p82 = scmp.ne.s32.totalorder %s77, %s79
      %p83 = scmp.eq.s32.totalorder %s29, 0
      %p84 = por %p82, %p83
      %p85 = scmp.ne.s32.totalorder %s77, %s79
      %p86 = scmp.eq.s32.totalorder %s34, 1
      %p87 = por %p85, %p86
      %p88 = scmp.ne.s32.totalorder %s79, %s80
      %p89 = scmp.eq.s32.totalorder %s34, 0
      %p90 = por %p88, %p89
      %p91 = scmp.ne.s32.totalorder %s79, %s80
      %p92 = scmp.eq.s32.totalorder %s35, 1
      %p93 = por %p91, %p92
      %p95 = scmp.ne.s32.totalorder %s80, %s94
      %p96 = scmp.eq.s32.totalorder %s35, 0
      %p97 = por %p95, %p96
      %s99 = sadd.s32 %s98, 1
      %p102 = scmp.eq.s32.totalorder %s29, 1
      %p103 = scmp.ne.s32.totalorder %s98, %s100
      %p104 = scmp.eq.s32.totalorder %s29, 0
      %p105 = por %p103, %p104
      %p106 = scmp.ne.s32.totalorder %s98, %s100
      %p107 = scmp.eq.s32.totalorder %s34, 1
      %p108 = por %p106, %p107
      %p109 = scmp.ne.s32.totalorder %s100, %s101
      %p110 = scmp.eq.s32.totalorder %s34, 0
      %p111 = por %p109, %p110
      %p112 = scmp.ne.s32.totalorder %s100, %s101
      %p113 = scmp.eq.s32.totalorder %s35, 1
      %p114 = por %p112, %p113
      %p116 = scmp.ne.s32.totalorder %s101, %s115
      %p117 = scmp.eq.s32.totalorder %s35, 0
      %p118 = por %p116, %p117
      %s120 = sadd.s32 %s119, 1
      %p123 = scmp.eq.s32.totalorder %s29, 1
      %p124 = scmp.ne.s32.totalorder %s119, %s121
      %p125 = scmp.eq.s32.totalorder %s29, 0
      %p126 = por %p124, %p125
      %p127 = scmp.ne.s32.totalorder %s119, %s121
      %p128 = scmp.eq.s32.totalorder %s34, 1
      %p129 = por %p127, %p128
      %p130 = scmp.ne.s32.totalorder %s121, %s122
      %p131 = scmp.eq.s32.totalorder %s34, 0
      %p132 = por %p130, %p131
      %p133 = scmp.ne.s32.totalorder %s121, %s122
      %p134 = scmp.eq.s32.totalorder %s35, 1
      %p135 = por %p133, %p134
      %p137 = scmp.ne.s32.totalorder %s122, %s136
      %p138 = scmp.eq.s32.totalorder %s35, 0
      %p139 = por %p137, %p138
      %s141 = sadd.s32 %s140, 1
      %p144 = scmp.eq.s32.totalorder %s29, 1
      %p145 = scmp.ne.s32.totalorder %s140, %s142
      %p146 = scmp.eq.s32.totalorder %s29, 0
      %p147 = por %p145, %p146
      %p148 = scmp.ne.s32.totalorder %s140, %s142
      %p149 = scmp.eq.s32.totalorder %s34, 1
      %p150 = por %p148, %p149
      %p151 = scmp.ne.s32.totalorder %s142, %s143
      %p152 = scmp.eq.s32.totalorder %s34, 0
      %p153 = por %p151, %p152
      %p154 = scmp.ne.s32.totalorder %s142, %s143
      %p155 = scmp.eq.s32.totalorder %s35, 1
      %p156 = por %p154, %p155
      %p158 = scmp.ne.s32.totalorder %s143, %s157
      %p159 = scmp.eq.s32.totalorder %s35, 0
      %p160 = por %p158, %p159
      %s162 = sadd.s32 %s161, 1
      %p165 = scmp.eq.s32.totalorder %s29, 1
      %p166 = scmp.ne.s32.totalorder %s161, %s163
      %p167 = scmp.eq.s32.totalorder %s29, 0
      %p168 = por %p166, %p167
      %p169 = scmp.ne.s32.totalorder %s161, %s163
      %p170 = scmp.eq.s32.totalorder %s34, 1
      %p171 = por %p169, %p170
      %p172 = scmp.ne.s32.totalorder %s163, %s164
      %p173 = scmp.eq.s32.totalorder %s34, 0
      %p174 = por %p172, %p173
      %p175 = scmp.ne.s32.totalorder %s163, %s164
      %p176 = scmp.eq.s32.totalorder %s35, 1
      %p177 = por %p175, %p176
      %p179 = scmp.ne.s32.totalorder %s164, %s178
      %p180 = scmp.eq.s32.totalorder %s35, 0
      %p181 = por %p179, %p180
      %s183 = sadd.s32 %s182, 1
      %p186 = scmp.eq.s32.totalorder %s29, 1
      %p187 = scmp.ne.s32.totalorder %s182, %s184
      %p188 = scmp.eq.s32.totalorder %s29, 0
      %p189 = por %p187, %p188
      %p190 = scmp.ne.s32.totalorder %s182, %s184
      %p191 = scmp.eq.s32.totalorder %s34, 1
      %p192 = por %p190, %p191
      %p193 = scmp.ne.s32.totalorder %s184, %s185
      %p194 = scmp.eq.s32.totalorder %s34, 0
      %p195 = por %p193, %p194
      %p196 = scmp.ne.s32.totalorder %s184, %s185
      %p197 = scmp.eq.s32.totalorder %s35, 1
      %p198 = por %p196, %p197
      %p200 = scmp.ne.s32.totalorder %s185, %s199
      %p201 = scmp.eq.s32.totalorder %s35, 0
      %p202 = por %p200, %p201
      %s204 = sadd.s32 %s203, 1
      %p207 = scmp.eq.s32.totalorder %s29, 1
      %p208 = scmp.ne.s32.totalorder %s203, %s205
      %p209 = scmp.eq.s32.totalorder %s29, 0
      %p210 = por %p208, %p209
      %p211 = scmp.ne.s32.totalorder %s203, %s205
      %p212 = scmp.eq.s32.totalorder %s34, 1
      %p213 = por %p211, %p212
      %p214 = scmp.ne.s32.totalorder %s205, %s206
      %p215 = scmp.eq.s32.totalorder %s34, 0
      %p216 = por %p214, %p215
      %p217 = scmp.ne.s32.totalorder %s205, %s206
      %p218 = scmp.eq.s32.totalorder %s35, 1
      %p219 = por %p217, %p218
      %p221 = scmp.ne.s32.totalorder %s206, %s220
      %p222 = scmp.eq.s32.totalorder %s35, 0
      %p223 = por %p221, %p222
      %s225 = sadd.s32 %s224, 1
      %p228 = scmp.eq.s32.totalorder %s29, 1
      %p229 = scmp.ne.s32.totalorder %s224, %s226
      %p230 = scmp.eq.s32.totalorder %s29, 0
      %p231 = por %p229, %p230
      %p232 = scmp.ne.s32.totalorder %s224, %s226
      %p233 = scmp.eq.s32.totalorder %s34, 1
      %p234 = por %p232, %p233
      %p235 = scmp.ne.s32.totalorder %s226, %s227
      %p236 = scmp.eq.s32.totalorder %s34, 0
      %p237 = por %p235, %p236
      %p238 = scmp.ne.s32.totalorder %s226, %s227
      %p239 = scmp.eq.s32.totalorder %s35, 1
      %p240 = por %p238, %p239
      %p242 = scmp.ne.s32.totalorder %s227, %s241
      %p243 = scmp.eq.s32.totalorder %s35, 0
      %p244 = por %p242, %p243
      %s245 = ssub.s32 %s36, %s48
      %s246 = ssub.s32 %s37, %s44
      %s247 = sor.u32 %s245, %s246
      %p248 = scmp.eq.s32.totalorder %s247, 0
      %s250 = sadd.s32 %s249, 1
      %s251 = scalar_select %p248, %s249, %s250
      %p254 = pneg %p248
      %p255 = scmp.eq.s32.totalorder %s29, 1
      %p256 = por %p254, %p255
      %p257 = scmp.ne.s32.totalorder %s249, %s252
      %p258 = scmp.eq.s32.totalorder %s29, 0
      %p259 = por %p257, %p258
      %p260 = scmp.ne.s32.totalorder %s249, %s252
      %p261 = scmp.eq.s32.totalorder %s34, 1
      %p262 = por %p260, %p261
      %p263 = scmp.ne.s32.totalorder %s252, %s253
      %p264 = scmp.eq.s32.totalorder %s34, 0
      %p265 = por %p263, %p264
      %p266 = scmp.ne.s32.totalorder %s252, %s253
      %p267 = scmp.eq.s32.totalorder %s35, 1
      %p268 = por %p266, %p267
      %p270 = scmp.ne.s32.totalorder %s253, %s269
      %p271 = scmp.eq.s32.totalorder %s35, 0
      %p272 = por %p270, %p271
      %s273 = ssub.s32 %s36, %s48
      %s274 = ssub.s32 %s37, %s44
      %s275 = sor.u32 %s273, %s274
      %p276 = scmp.eq.s32.totalorder %s275, 0
      %s278 = sadd.s32 %s277, 1
      %s279 = scalar_select %p276, %s277, %s278
      %p282 = pneg %p276
      %p283 = scmp.eq.s32.totalorder %s29, 1
      %p284 = por %p282, %p283
      %p285 = scmp.ne.s32.totalorder %s277, %s280
      %p286 = scmp.eq.s32.totalorder %s29, 0
      %p287 = por %p285, %p286
      %p288 = scmp.ne.s32.totalorder %s277, %s280
      %p289 = scmp.eq.s32.totalorder %s34, 1
      %p290 = por %p288, %p289
      %p291 = scmp.ne.s32.totalorder %s280, %s281
      %p292 = scmp.eq.s32.totalorder %s34, 0
      %p293 = por %p291, %p292
      %p294 = scmp.ne.s32.totalorder %s280, %s281
      %p295 = scmp.eq.s32.totalorder %s35, 1
      %p296 = por %p294, %p295
      %p298 = scmp.ne.s32.totalorder %s281, %s297
      %p299 = scmp.eq.s32.totalorder %s35, 0
      %p300 = por %p298, %p299
      %s301 = ssub.s32 %s36, %s48
      %s302 = ssub.s32 %s37, %s44
      %s303 = sor.u32 %s301, %s302
      %p304 = scmp.eq.s32.totalorder %s303, 0
      %s306 = sadd.s32 %s305, 1
      %s307 = scalar_select %p304, %s305, %s306
      %p310 = pneg %p304
      %p311 = scmp.eq.s32.totalorder %s29, 1
      %p312 = por %p310, %p311
      %p313 = scmp.ne.s32.totalorder %s305, %s308
      %p314 = scmp.eq.s32.totalorder %s29, 0
      %p315 = por %p313, %p314
      %p316 = scmp.ne.s32.totalorder %s305, %s308
      %p317 = scmp.eq.s32.totalorder %s34, 1
      %p318 = por %p316, %p317
      %p319 = scmp.ne.s32.totalorder %s308, %s309
      %p320 = scmp.eq.s32.totalorder %s34, 0
      %p321 = por %p319, %p320
      %p322 = scmp.ne.s32.totalorder %s308, %s309
      %p323 = scmp.eq.s32.totalorder %s35, 1
      %p324 = por %p322, %p323
      %p326 = scmp.ne.s32.totalorder %s309, %s325
      %p327 = scmp.eq.s32.totalorder %s35, 0
      %p328 = por %p326, %p327
      %p329 = scmp.le.s32.totalorder 1, %s29
      %p330 = scmp.lt.s32.totalorder %s29, 3
      %p331 = pnand %p329, %p330
      %p332 = pneg %p331
      // Predicated region
      $region9: #{tpu_custom_call.1} parent=5 // pred_check
        _
      $region10: #{tpu_custom_call.1} parent=5 // pred_check_branch
        %334 = sbr.rel (%p331) target = $region12
      $region11: #{tpu_custom_call.1} parent=5 // pred_region
        %s335 = ssub.s32 %s29, 1
        // Predicated region
        $region13: #{tpu_custom_call.1} parent=11 // pred_check
          %p336 = pneg %p90
        $region14: #{tpu_custom_call.1} parent=11 // pred_check_branch
          %338 = sbr.rel (%p336) target = $region16
        $region15: #{tpu_custom_call.1} parent=11 // pred_region
          _
        $region16: #{tpu_custom_call.1} parent=11 // pred_fallthru
          _
        // Predicated region
        $region17: #{tpu_custom_call.1} parent=11 // pred_check
          %p339 = pneg %p111
        $region18: #{tpu_custom_call.1} parent=11 // pred_check_branch
          %341 = sbr.rel (%p339) target = $region20
        $region19: #{tpu_custom_call.1} parent=11 // pred_region
          _
        $region20: #{tpu_custom_call.1} parent=11 // pred_fallthru
          _
        // Predicated region
        $region21: #{tpu_custom_call.1} parent=11 // pred_check
          %p342 = pneg %p132
        $region22: #{tpu_custom_call.1} parent=11 // pred_check_branch
          %344 = sbr.rel (%p342) target = $region24
        $region23: #{tpu_custom_call.1} parent=11 // pred_region
          %s346 = ssub.s32 256, 256
          %347 = vsyncadd [#allocation6], %s346
          %s348 = sshll.u32 [#allocation5], 4
          %s349 = int_to_ptr.vmem [resolvable:$true] %s348
          %354 = dma.hbm_to_vmem [thread:$0]  %s3, 256, %s349, [#allocation6], 64, 64, 4
        $region24: #{tpu_custom_call.1} parent=11 // pred_fallthru
          _
        // Predicated region
        $region25: #{tpu_custom_call.1} parent=11 // pred_check
          %p355 = pneg %p153
        $region26: #{tpu_custom_call.1} parent=11 // pred_check_branch
          %357 = sbr.rel (%p355) target = $region28
        $region27: #{tpu_custom_call.1} parent=11 // pred_region
          _
        $region28: #{tpu_custom_call.1} parent=11 // pred_fallthru
          _
        // Predicated region
        $region29: #{tpu_custom_call.1} parent=11 // pred_check
          %p358 = pneg %p174
        $region30: #{tpu_custom_call.1} parent=11 // pred_check_branch
          %360 = sbr.rel (%p358) target = $region32
        $region31: #{tpu_custom_call.1} parent=11 // pred_region
          %s362 = ssub.s32 256, 256
          %363 = vsyncadd [#allocation6], %s362
          %s364 = sshll.u32 [#allocation7], 4
          %s365 = int_to_ptr.vmem [resolvable:$true] %s364
          %370 = dma.hbm_to_vmem [thread:$0]  %s5, 256, %s365, [#allocation6], 64, 64, 4
        $region32: #{tpu_custom_call.1} parent=11 // pred_fallthru
          _
        // Predicated region
        $region33: #{tpu_custom_call.1} parent=11 // pred_check
          %p371 = pneg %p195
        $region34: #{tpu_custom_call.1} parent=11 // pred_check_branch
          %373 = sbr.rel (%p371) target = $region36
        $region35: #{tpu_custom_call.1} parent=11 // pred_region
          _
        $region36: #{tpu_custom_call.1} parent=11 // pred_fallthru
          _
        // Predicated region
        $region37: #{tpu_custom_call.1} parent=11 // pred_check
          %p374 = pneg %p216
        $region38: #{tpu_custom_call.1} parent=11 // pred_check_branch
          %376 = sbr.rel (%p374) target = $region40
        $region39: #{tpu_custom_call.1} parent=11 // pred_region
          %s378 = ssub.s32 256, 256
          %379 = vsyncadd [#allocation9], %s378
          %s380 = sshll.u32 [#allocation8], 4
          %s381 = int_to_ptr.vmem [resolvable:$true] %s380
          %386 = dma.hbm_to_vmem [thread:$0]  %s7, 256, %s381, [#allocation9], 64, 64, 4
        $region40: #{tpu_custom_call.1} parent=11 // pred_fallthru
          _
        // Predicated region
        $region41: #{tpu_custom_call.1} parent=11 // pred_check
          %p387 = pneg %p237
        $region42: #{tpu_custom_call.1} parent=11 // pred_check_branch
          %389 = sbr.rel (%p387) target = $region44
        $region43: #{tpu_custom_call.1} parent=11 // pred_region
          _
        $region44: #{tpu_custom_call.1} parent=11 // pred_fallthru
          _
      $region12: #{tpu_custom_call.1} parent=5 // pred_fallthru
        _
      %p390 = scmp.lt.s32.totalorder %s29, 2
      // Predicated region
      $region45: #{tpu_custom_call.1} parent=5 // pred_check
        %p391 = pneg %p390
      $region46: #{tpu_custom_call.1} parent=5 // pred_check_branch
        %393 = sbr.rel (%p391) target = $region48
      $region47: #{tpu_custom_call.1} parent=5 // pred_region
        // Predicated region
        $region49: #{tpu_custom_call.1} parent=47 // pred_check
          %p394 = pneg %p63
        $region50: #{tpu_custom_call.1} parent=47 // pred_check_branch
          %396 = sbr.rel (%p394) target = $region52
        $region51: #{tpu_custom_call.1} parent=47 // pred_region
          %s397 = sand.u32 %s53, 1
          %s398 = scalar_lea.sflag [#allocation3], %s397
          %s399 = sand.u32 %s53, 1
          %s400 = smul.addr %s399, 8
          %s401 = scalar_lea.vmem [#allocation2], %s400
          %s403 = ssub.s32 128, 128
          %404 = vsyncadd %s398, %s403
          %s405 = sadd.s32 %s37, %s36
          %s406 = smul.addr %s405, 128
          %s407 = scalar_lea.hbm %s0, %s406
          %s409 = sshll.u32 %s401, 4
          %s410 = int_to_ptr.vmem [resolvable:$true] %s409
          %412 = dma.hbm_to_vmem [thread:$0]  %s407, 128, %s410, %s398
        $region52: #{tpu_custom_call.1} parent=47 // pred_fallthru
          _
      $region48: #{tpu_custom_call.1} parent=5 // pred_fallthru
        _
      %p413 = scmp.le.s32.totalorder 1, %s29
      %p414 = scmp.lt.s32.totalorder %s29, 3
      %p415 = pnand %p413, %p414
      %p416 = pneg %p415
      // Predicated region
      $region53: #{tpu_custom_call.1} parent=5 // pred_check
        _
      $region54: #{tpu_custom_call.1} parent=5 // pred_check_branch
        %418 = sbr.rel (%p415) target = $region56
      $region55: #{tpu_custom_call.1} parent=5 // pred_region
        %s419 = ssub.s32 %s29, 1
        %s420 = sand.u32 %s56, 1
        %s421 = scalar_lea.sflag [#allocation3], %s420
        %s422 = sand.u32 %s56, 1
        %s423 = smul.addr %s422, 8
        %s424 = scalar_lea.vmem [#allocation2], %s423
        // Predicated region
        $region57: #{tpu_custom_call.1} parent=55 // pred_check
          %p425 = pneg %p69
        $region58: #{tpu_custom_call.1} parent=55 // pred_check_branch
          %427 = sbr.rel (%p425) target = $region60
        $region59: #{tpu_custom_call.1} parent=55 // pred_region
          %428 = dma.done %s421, 128
        $region60: #{tpu_custom_call.1} parent=55 // pred_fallthru
          _
        // Predicated region
        $region61: #{tpu_custom_call.1} parent=55 // pred_check
          %p429 = pneg %p132
        $region62: #{tpu_custom_call.1} parent=55 // pred_check_branch
          %431 = sbr.rel (%p429) target = $region64
        $region63: #{tpu_custom_call.1} parent=55 // pred_region
          %432 = dma.done [#allocation6], 256
        $region64: #{tpu_custom_call.1} parent=55 // pred_fallthru
          _
        // Predicated region
        $region65: #{tpu_custom_call.1} parent=55 // pred_check
          %p433 = pneg %p174
        $region66: #{tpu_custom_call.1} parent=55 // pred_check_branch
          %435 = sbr.rel (%p433) target = $region68
        $region67: #{tpu_custom_call.1} parent=55 // pred_region
          %436 = dma.done [#allocation6], 256
        $region68: #{tpu_custom_call.1} parent=55 // pred_fallthru
          _
        // Predicated region
        $region69: #{tpu_custom_call.1} parent=55 // pred_check
          %p437 = pneg %p216
        $region70: #{tpu_custom_call.1} parent=55 // pred_check_branch
          %439 = sbr.rel (%p437) target = $region72
        $region71: #{tpu_custom_call.1} parent=55 // pred_region
          %440 = dma.done [#allocation9], 256
        $region72: #{tpu_custom_call.1} parent=55 // pred_fallthru
          _
        %s441 = sand.u32 %s56, 1
        %s442 = scalar_lea.sflag [#allocation3], %s441
        %s443 = sand.u32 %s56, 1
        %s444 = smul.addr %s443, 8
        %s445 = scalar_lea.vmem [#allocation2], %s444
        %p446 = pneg %p69
        %p447 = pneg %p66
        %p448 = pneg %p90
        %p449 = pneg %p87
        %p450 = pneg %p111
        %p451 = pneg %p108
        %p452 = pneg %p132
        %p453 = pneg %p129
        %p454 = pneg %p153
        %p455 = pneg %p150
        %p456 = pneg %p174
        %p457 = pneg %p171
        %p458 = pneg %p195
        %p459 = pneg %p192
        %p460 = pneg %p216
        %p461 = pneg %p213
        %p462 = pneg %p237
        %p463 = pneg %p234
        %p464 = pneg %p265
        %p465 = pneg %p262
        %s466 = sand.u32 %s252, 1
        %s467 = scalar_lea.sflag [#allocation4], %s466
        %s468 = sand.u32 %s252, 1
        %s469 = smul.addr %s468, 4
        %s470 = scalar_lea.vmem [#allocation10], %s469
        %p471 = pneg %p293
        %p472 = pneg %p290
        %s473 = sand.u32 %s34, 1
        %s474 = scalar_lea.sflag [#allocation12], %s473
        %s475 = sand.u32 %s280, 1
        %s476 = smul.addr %s475, 4
        %s477 = scalar_lea.vmem [#allocation11], %s476
        %p478 = pneg %p321
        %p479 = pneg %p318
        %s480 = sand.u32 %s34, 1
        %s481 = scalar_lea.sflag [#allocation12], %s480
        %s482 = sand.u32 %s308, 1
        %s483 = smul.addr %s482, 4
        %s484 = scalar_lea.vmem [#allocation13], %s483
        %v486 = vld [vmem:[%s424] sm:$0xff]
        %v487 = vld [vmem:[%s1] sm:$0x1]
        %v488 = vld [vmem:[%s2] sm:$0x1]
        %vm489 = vcmask 261120
        %v490 = vsel %vm489, %v486, 0.0
        %491 = vadd.xlane.f32.xlu0 %v490
        %v492 = vpop.xlane.xlu0 %491
        %v493 = vrcp.pop 32.0
        %v494 = vmul.f32 %v492, %v493
        %v495 = vsub.f32 %v486, %v494
        %v496 = vmul.f32 %v495, %v495
        %v497 = vsel %vm489, %v496, 0.0
        %498 = vadd.xlane.f32.xlu0 %v497
        %v499 = vpop.xlane.xlu0 %498
        %v500 = vmul.f32 %v499, %v493
        %v501 = vadd.f32 %v500, 1e-05
        %v502 = vrsqrt.pop %v501
        %v503 = vmul.f32 %v495, %v502
        %v505 = vlaneseq
        %v506 = vshrl.u32 %v505, 7
        %v507 = vsub.s32 0, %v506
        %v508 = vrot.slane %v487, %v507
        %v510 = vmul.f32 %v503, %v508
        %v512 = vlaneseq
        %v513 = vshrl.u32 %v512, 7
        %v514 = vsub.s32 0, %v513
        %v515 = vrot.slane %v488, %v514
        %v517 = vadd.f32 %v510, %v515
        %v518 = vpack.c.bf16 %v517, %v517
        %v519 = vld [vmem:[#allocation5] sm:$0xf]
        %v520 = vld [vmem:[#allocation5 + $0x4] sm:$0xf]
        %v521 = vld [vmem:[#allocation5 + $0x8] sm:$0xf]
        %v522 = vld [vmem:[#allocation5 + $0xc] sm:$0xf]
        %v523 = vld [vmem:[%s4] sm:$0x1]
        %v525 = vlaneseq
        %v526 = vshrl.u32 %v525, 7
        %v527 = vsub.s32 0, %v526
        %v528 = vrot.slane %v523, %v527
        %v534 = vunpack.c.l.b16 %v519
        %v535 = vunpack.c.l.b16 %v520
        %v536 = vunpack.c.l.b16 %v521
        %v537 = vunpack.c.l.b16 %v522
        %v538 = vpack.c.b16 %v535, %v534
        %v539 = vpack.c.b16 %v537, %v536
        %v543 = vsel %vm489, %v518, 0
        %545 = vmatprep.subr.bf16.mxu0 0
        %546 = vmatpush1.bf16.msra.mxu0 0
        %547 = vmatprep.subr.bf16.mxu0 0
        %548 = vmatpush1.bf16.msra.mxu0 0
        %549 = vmatprep.subr.bf16.mxu0 0
        %550 = vmatpush1.bf16.msra.mxu0 0
        %551 = vmatprep.subr.bf16.mxu0 0
        %552 = vmatpush1.bf16.msra.mxu0 0
        %553 = vmatprep.subr.bf16.mxu0 0
        %554 = vmatpush1.bf16.msra.mxu0 0
        %555 = vmatprep.subr.bf16.mxu0 0
        %556 = vmatpush1.bf16.msra.mxu0 0
        %557 = vmatprep.subr.bf16.mxu0 0
        %558 = vmatpush1.bf16.msra.mxu0 %v539
        %559 = vmatprep.subr.bf16.mxu0 0
        %560 = vmatpush1.bf16.msra.mxu0 %v538
        %561 = vmatprep.subr.bf16.mxu0 0
        %562 = vmatpush2.bf16.msra.mxu0 0
        %563 = vmatprep.subr.bf16.mxu0 0
        %564 = vmatpush2.bf16.msra.mxu0 0
        %565 = vmatprep.subr.bf16.mxu0 0
        %566 = vmatpush2.bf16.msra.mxu0 0
        %567 = vmatprep.subr.bf16.mxu0 0
        %568 = vmatpush2.bf16.msra.mxu0 0
        %569 = vmatprep.subr.bf16.mxu0 0
        %570 = vmatpush2.bf16.msra.mxu0 0
        %571 = vmatprep.subr.bf16.mxu0 0
        %572 = vmatpush2.bf16.msra.mxu0 0
        %573 = vmatprep.subr.bf16.mxu0 0
        %574 = vmatpush2.bf16.msra.mxu0 0
        %575 = vmatprep.subr.bf16.mxu0 0
        %576 = vmatpush2.bf16.msra.mxu0 0
        %577 = vmatprep.mubr.bf16.mxu0 0
        %578 = vmatmul.mubr.bf16.gmra.mxu0 %v543
        %v579 = vpop.f32.mrf.mxu0
        %v580 = vadd.f32 %v528, %v579
        %v581 = vpop.f32.mrf.mxu0
        %v582 = vpop.f32.mrf.mxu0
        %v583 = vpop.f32.mrf.mxu0
        %584 = vdwg.mxu0
        %v585 = vmul.f32 %v580, 0.35355338
        %v586 = vpack.c.bf16 %v585, %v585
        %vm587 = vcmask 257024
        %588 = vst.msk [vmem:[%s470] sm:$0xf] %vm587, %v586
        %v589 = vld [vmem:[#allocation7] sm:$0xf]
        %v590 = vld [vmem:[#allocation7 + $0x4] sm:$0xf]
        %v591 = vld [vmem:[#allocation7 + $0x8] sm:$0xf]
        %v592 = vld [vmem:[#allocation7 + $0xc] sm:$0xf]
        %v593 = vld [vmem:[%s6] sm:$0x1]
        %v595 = vlaneseq
        %v596 = vshrl.u32 %v595, 7
        %v597 = vsub.s32 0, %v596
        %v598 = vrot.slane %v593, %v597
        %v604 = vunpack.c.l.b16 %v589
        %v605 = vunpack.c.l.b16 %v590
        %v606 = vunpack.c.l.b16 %v591
        %v607 = vunpack.c.l.b16 %v592
        %v608 = vpack.c.b16 %v605, %v604
        %v609 = vpack.c.b16 %v607, %v606
        %612 = vmatprep.subr.bf16.mxu0 0
        %613 = vmatpush1.bf16.msra.mxu0 0
        %614 = vmatprep.subr.bf16.mxu0 0
        %615 = vmatpush1.bf16.msra.mxu0 0
        %616 = vmatprep.subr.bf16.mxu0 0
        %617 = vmatpush1.bf16.msra.mxu0 0
        %618 = vmatprep.subr.bf16.mxu0 0
        %619 = vmatpush1.bf16.msra.mxu0 0
        %620 = vmatprep.subr.bf16.mxu0 0
        %621 = vmatpush1.bf16.msra.mxu0 0
        %622 = vmatprep.subr.bf16.mxu0 0
        %623 = vmatpush1.bf16.msra.mxu0 0
        %624 = vmatprep.subr.bf16.mxu0 0
        %625 = vmatpush1.bf16.msra.mxu0 %v609
        %626 = vmatprep.subr.bf16.mxu0 0
        %627 = vmatpush1.bf16.msra.mxu0 %v608
        %628 = vmatprep.subr.bf16.mxu0 0
        %629 = vmatpush2.bf16.msra.mxu0 0
        %630 = vmatprep.subr.bf16.mxu0 0
        %631 = vmatpush2.bf16.msra.mxu0 0
        %632 = vmatprep.subr.bf16.mxu0 0
        %633 = vmatpush2.bf16.msra.mxu0 0
        %634 = vmatprep.subr.bf16.mxu0 0
        %635 = vmatpush2.bf16.msra.mxu0 0
        %636 = vmatprep.subr.bf16.mxu0 0
        %637 = vmatpush2.bf16.msra.mxu0 0
        %638 = vmatprep.subr.bf16.mxu0 0
        %639 = vmatpush2.bf16.msra.mxu0 0
        %640 = vmatprep.subr.bf16.mxu0 0
        %641 = vmatpush2.bf16.msra.mxu0 0
        %642 = vmatprep.subr.bf16.mxu0 0
        %643 = vmatpush2.bf16.msra.mxu0 0
        %644 = vmatprep.mubr.bf16.mxu0 0
        %645 = vmatmul.mubr.bf16.gmra.mxu0 %v543
        %v646 = vpop.f32.mrf.mxu0
        %v647 = vadd.f32 %v598, %v646
        %v648 = vpop.f32.mrf.mxu0
        %v649 = vpop.f32.mrf.mxu0
        %v650 = vpop.f32.mrf.mxu0
        %651 = vdwg.mxu0
        %v652 = vpack.c.bf16 %v647, %v647
        %653 = vst.msk [vmem:[%s477] sm:$0xf] %vm587, %v652
        %v654 = vld [vmem:[#allocation8] sm:$0xf]
        %v655 = vld [vmem:[#allocation8 + $0x4] sm:$0xf]
        %v656 = vld [vmem:[#allocation8 + $0x8] sm:$0xf]
        %v657 = vld [vmem:[#allocation8 + $0xc] sm:$0xf]
        %v658 = vld [vmem:[%s8] sm:$0x1]
        %v660 = vlaneseq
        %v661 = vshrl.u32 %v660, 7
        %v662 = vsub.s32 0, %v661
        %v663 = vrot.slane %v658, %v662
        %v669 = vunpack.c.l.b16 %v654
        %v670 = vunpack.c.l.b16 %v655
        %v671 = vunpack.c.l.b16 %v656
        %v672 = vunpack.c.l.b16 %v657
        %v673 = vpack.c.b16 %v670, %v669
        %v674 = vpack.c.b16 %v672, %v671
        %677 = vmatprep.subr.bf16.mxu0 0
        %678 = vmatpush1.bf16.msra.mxu0 0
        %679 = vmatprep.subr.bf16.mxu0 0
        %680 = vmatpush1.bf16.msra.mxu0 0
        %681 = vmatprep.subr.bf16.mxu0 0
        %682 = vmatpush1.bf16.msra.mxu0 0
        %683 = vmatprep.subr.bf16.mxu0 0
        %684 = vmatpush1.bf16.msra.mxu0 0
        %685 = vmatprep.subr.bf16.mxu0 0
        %686 = vmatpush1.bf16.msra.mxu0 0
        %687 = vmatprep.subr.bf16.mxu0 0
        %688 = vmatpush1.bf16.msra.mxu0 0
        %689 = vmatprep.subr.bf16.mxu0 0
        %690 = vmatpush1.bf16.msra.mxu0 %v674
        %691 = vmatprep.subr.bf16.mxu0 0
        %692 = vmatpush1.bf16.msra.mxu0 %v673
        %693 = vmatprep.subr.bf16.mxu0 0
        %694 = vmatpush2.bf16.msra.mxu0 0
        %695 = vmatprep.subr.bf16.mxu0 0
        %696 = vmatpush2.bf16.msra.mxu0 0
        %697 = vmatprep.subr.bf16.mxu0 0
        %698 = vmatpush2.bf16.msra.mxu0 0
        %699 = vmatprep.subr.bf16.mxu0 0
        %700 = vmatpush2.bf16.msra.mxu0 0
        %701 = vmatprep.subr.bf16.mxu0 0
        %702 = vmatpush2.bf16.msra.mxu0 0
        %703 = vmatprep.subr.bf16.mxu0 0
        %704 = vmatpush2.bf16.msra.mxu0 0
        %705 = vmatprep.subr.bf16.mxu0 0
        %706 = vmatpush2.bf16.msra.mxu0 0
        %707 = vmatprep.subr.bf16.mxu0 0
        %708 = vmatpush2.bf16.msra.mxu0 0
        %709 = vmatprep.mubr.bf16.mxu0 0
        %710 = vmatmul.mubr.bf16.gmra.mxu0 %v543
        %v711 = vpop.f32.mrf.mxu0
        %v712 = vadd.f32 %v663, %v711
        %v713 = vpop.f32.mrf.mxu0
        %v714 = vpop.f32.mrf.mxu0
        %v715 = vpop.f32.mrf.mxu0
        %716 = vdwg.mxu0
        %v717 = vpack.c.bf16 %v712, %v712
        %718 = vst.msk [vmem:[%s484] sm:$0xf] %vm587, %v717
        %s719 = sand.u32 %s252, 1
        %s720 = scalar_lea.sflag [#allocation4], %s719
        %s721 = sand.u32 %s252, 1
        %s722 = smul.addr %s721, 4
        %s723 = scalar_lea.vmem [#allocation10], %s722
        %s724 = sand.u32 %s34, 1
        %s725 = scalar_lea.sflag [#allocation12], %s724
        %s726 = sand.u32 %s280, 1
        %s727 = smul.addr %s726, 4
        %s728 = scalar_lea.vmem [#allocation11], %s727
        %s729 = sand.u32 %s34, 1
        %s730 = scalar_lea.sflag [#allocation12], %s729
        %s731 = sand.u32 %s308, 1
        %s732 = smul.addr %s731, 4
        %s733 = scalar_lea.vmem [#allocation13], %s732
        // Predicated region
        $region73: #{tpu_custom_call.1} parent=55 // pred_check
          %p734 = pneg %p262
        $region74: #{tpu_custom_call.1} parent=55 // pred_check_branch
          %736 = sbr.rel (%p734) target = $region76
        $region75: #{tpu_custom_call.1} parent=55 // pred_region
          %s738 = ssub.s32 64, 64
          %739 = vsyncadd %s720, %s738
          %s740 = sadd.s32 %s39, %s38
          %s741 = smul.addr %s740, 64
          %s742 = scalar_lea.hbm %s9, %s741
          %s744 = sshll.u32 %s723, 4
          %s745 = int_to_ptr.vmem [resolvable:$true] %s744
          %747 = dma.vmem_to_hbm [thread:$0]  %s745, 64, %s742, %s720
        $region76: #{tpu_custom_call.1} parent=55 // pred_fallthru
          _
        // Predicated region
        $region77: #{tpu_custom_call.1} parent=55 // pred_check
          %p748 = pneg %p290
        $region78: #{tpu_custom_call.1} parent=55 // pred_check_branch
          %750 = sbr.rel (%p748) target = $region80
        $region79: #{tpu_custom_call.1} parent=55 // pred_region
          %s752 = ssub.s32 64, 64
          %753 = vsyncadd %s725, %s752
          %s754 = sadd.s32 %s39, %s38
          %s755 = smul.addr %s754, 64
          %s756 = scalar_lea.hbm %s10, %s755
          %s758 = sshll.u32 %s728, 4
          %s759 = int_to_ptr.vmem [resolvable:$true] %s758
          %761 = dma.vmem_to_hbm [thread:$0]  %s759, 64, %s756, %s725
        $region80: #{tpu_custom_call.1} parent=55 // pred_fallthru
          _
        // Predicated region
        $region81: #{tpu_custom_call.1} parent=55 // pred_check
          %p762 = pneg %p318
        $region82: #{tpu_custom_call.1} parent=55 // pred_check_branch
          %764 = sbr.rel (%p762) target = $region84
        $region83: #{tpu_custom_call.1} parent=55 // pred_region
          %s766 = ssub.s32 64, 64
          %767 = vsyncadd %s730, %s766
          %s768 = sadd.s32 %s39, %s38
          %s769 = smul.addr %s768, 64
          %s770 = scalar_lea.hbm %s11, %s769
          %s772 = sshll.u32 %s733, 4
          %s773 = int_to_ptr.vmem [resolvable:$true] %s772
          %775 = dma.vmem_to_hbm [thread:$0]  %s773, 64, %s770, %s730
        $region84: #{tpu_custom_call.1} parent=55 // pred_fallthru
          _
      $region56: #{tpu_custom_call.1} parent=5 // pred_fallthru
        _
      %p776 = scmp.le.s32.totalorder 2, %s29
      // Predicated region
      $region85: #{tpu_custom_call.1} parent=5 // pred_check
        %p777 = pneg %p776
      $region86: #{tpu_custom_call.1} parent=5 // pred_check_branch
        %779 = sbr.rel (%p777) target = $region88
      $region87: #{tpu_custom_call.1} parent=5 // pred_region
        %s780 = ssub.s32 %s29, 2
        // Predicated region
        $region89: #{tpu_custom_call.1} parent=87 // pred_check
          %p781 = pneg %p268
        $region90: #{tpu_custom_call.1} parent=87 // pred_check_branch
          %783 = sbr.rel (%p781) target = $region92
        $region91: #{tpu_custom_call.1} parent=87 // pred_region
          %s784 = sand.u32 %s253, 1
          %s785 = scalar_lea.sflag [#allocation4], %s784
          %s786 = sand.u32 %s253, 1
          %s787 = smul.addr %s786, 4
          %s788 = scalar_lea.vmem [#allocation10], %s787
          %789 = dma.done %s785, 64
        $region92: #{tpu_custom_call.1} parent=87 // pred_fallthru
          _
        // Predicated region
        $region93: #{tpu_custom_call.1} parent=87 // pred_check
          %p790 = pneg %p296
        $region94: #{tpu_custom_call.1} parent=87 // pred_check_branch
          %792 = sbr.rel (%p790) target = $region96
        $region95: #{tpu_custom_call.1} parent=87 // pred_region
          %s793 = sand.u32 %s35, 1
          %s794 = scalar_lea.sflag [#allocation12], %s793
          %s795 = sand.u32 %s281, 1
          %s796 = smul.addr %s795, 4
          %s797 = scalar_lea.vmem [#allocation11], %s796
          %798 = dma.done %s794, 64
        $region96: #{tpu_custom_call.1} parent=87 // pred_fallthru
          _
        // Predicated region
        $region97: #{tpu_custom_call.1} parent=87 // pred_check
          %p799 = pneg %p324
        $region98: #{tpu_custom_call.1} parent=87 // pred_check_branch
          %801 = sbr.rel (%p799) target = $region100
        $region99: #{tpu_custom_call.1} parent=87 // pred_region
          %s802 = sand.u32 %s35, 1
          %s803 = scalar_lea.sflag [#allocation12], %s802
          %s804 = sand.u32 %s309, 1
          %s805 = smul.addr %s804, 4
          %s806 = scalar_lea.vmem [#allocation13], %s805
          %807 = dma.done %s803, 64
        $region100: #{tpu_custom_call.1} parent=87 // pred_fallthru
          _
      $region88: #{tpu_custom_call.1} parent=5 // pred_fallthru
        _
    $region6: #{tpu_custom_call.1} parent=1 // loop_footer
      %s33 = sadd.s32 1, %s29
    $region7: #{tpu_custom_call.1} parent=1 // loop_footer_branch
      %28 = sbr.rel target = $region3
    $region8: #{tpu_custom_call.1} parent=1 // loop_exit
      _
    %808 = vsyncpa [#allocation3], 1
    %s809 = scalar_lea.sflag [#allocation3], 1
    %810 = vsyncpa %s809, 1
    %811 = vsyncpa [#allocation6], 1
    %812 = vsyncpa [#allocation9], 1
    %813 = vsyncpa [#allocation4], 1
    %s814 = scalar_lea.sflag [#allocation4], 1
    %815 = vsyncpa %s814, 1
    %816 = vsyncpa [#allocation12], 1
    %s817 = scalar_lea.sflag [#allocation12], 1
    %818 = vsyncpa %s817, 1

</llo_original>
